<compile_context>
chip_gen: v7x
topology: tpu7x:2x2x1
jax: 0.10.0
libtpu: 0.0.40
codegen_flags: <defaults>
</compile_context>

<pallas_src>
import jax
import jax.numpy as jnp
from jax.experimental import pallas as pl
from jax.experimental.pallas import tpu as pltpu


def _drelu_kernel(slope_p_ref, slope_n_ref, x_ref, o_ref):
    sp = slope_p_ref[0]                     # f32 scalar from SMEM
    sn = slope_n_ref[0]
    xf = x_ref[...].astype(jnp.float32)
    # slope_p*relu(x) + slope_n*relu(-x)  ==  x * where(x>=0, sp, -sn)
    scale = jnp.where(xf >= 0, sp, -sn)
    o_ref[...] = (xf * scale).astype(o_ref.dtype)


def drelu(x, slope_p, slope_n):
    """Apply DReLU elementwise. x: any shape (e.g. NCHW). slopes: scalars."""
    orig_shape = x.shape
    orig_dtype = x.dtype
    n = x.size
    itemsize = jnp.dtype(orig_dtype).itemsize

    LANE = 128
    x_flat = jnp.ravel(x)
    rem = n % LANE
    padded = rem != 0
    if padded:
        # Rare fallback: pad flat length up to a lane multiple.
        x_flat = jnp.pad(x_flat, (0, LANE - rem))
    n_flat = x_flat.size

    # Widest lane-dense width (multiple of 128) that divides the flat size.
    for W in (4096, 2048, 1024, 512, 256, 128):
        if n_flat % W == 0:
            break
    rows = n_flat // W
    x2d = x_flat.reshape(rows, W)

    # Block sizing: target ~4 MiB per block (in + out double-buffered
    # => ~16 MiB resident, safe even under v7x's 32 MiB default scoped VMEM).
    TARGET_BLOCK_BYTES = 4 * 1024 * 1024
    if rows <= 8:
        tile_rows = rows                    # single full-extent block
    else:
        bytes_per_row = W * itemsize
        tile_rows = min(rows, max(8, TARGET_BLOCK_BYTES // bytes_per_row))
        tile_rows = max(8, (tile_rows // 8) * 8)
        # Keep the parallel grid axis populated (>= 8 steps when possible)
        # so v7x can shard the grid across its 2 TensorCores.
        min_steps = 8
        if rows >= min_steps * 8 and pl.cdiv(rows, tile_rows) < min_steps:
            tile_rows = max(8, (pl.cdiv(rows, min_steps) // 8) * 8)

    grid = (pl.cdiv(rows, tile_rows),)

    # Slopes stay in f32 for full-precision multiply regardless of x dtype.
    sp = jnp.asarray(slope_p, dtype=jnp.float32).reshape(1)
    sn = jnp.asarray(slope_n, dtype=jnp.float32).reshape(1)

    out2d = pl.pallas_call(
        _drelu_kernel,
        out_shape=jax.ShapeDtypeStruct((rows, W), orig_dtype),
        grid_spec=pltpu.PrefetchScalarGridSpec(
            num_scalar_prefetch=0,
            grid=grid,
            in_specs=[
                pl.BlockSpec(memory_space=pltpu.MemorySpace.SMEM),   # slope_p
                pl.BlockSpec(memory_space=pltpu.MemorySpace.SMEM),   # slope_n
                pl.BlockSpec((tile_rows, W), lambda i: (i, 0)),
            ],
            out_specs=pl.BlockSpec((tile_rows, W), lambda i: (i, 0)),
        ),
        compiler_params=pltpu.CompilerParams(
            dimension_semantics=("parallel",)),
    )(sp, sn, x2d)

    out_flat = out2d.reshape(-1)
    if padded:
        out_flat = out_flat[:n]
    return out_flat.reshape(orig_shape)


if __name__ == "__main__":
    key = jax.random.PRNGKey(0)
    # NCHW input, small shapes
    x = jax.random.normal(key, (2, 4, 16, 16), dtype=jnp.float32)

    def ref_fn(x, sp, sn):
        return sp * jnp.maximum(x, 0.0) + sn * jnp.maximum(-x, 0.0)

    # 1) Deterministic parameter init matching the PyTorch module's __init__.
    slope_p = jnp.float32(1.0)
    slope_n = jnp.float32(0.0)
    out = jax.block_until_ready(drelu(x, slope_p, slope_n))
    assert out.shape == x.shape and out.dtype == x.dtype
    assert jnp.allclose(out, ref_fn(x, slope_p, slope_n), atol=1e-6, rtol=1e-6)

    # 2) Non-trivial slopes to exercise both branches.
    slope_p2 = jnp.float32(0.7)
    slope_n2 = jnp.float32(0.25)
    out2 = jax.block_until_ready(drelu(x, slope_p2, slope_n2))
    assert jnp.allclose(out2, ref_fn(x, slope_p2, slope_n2), atol=1e-6, rtol=1e-6)

    print("KERNEL_OK")
</pallas_src>

<mosaic_0001>
module attributes {stable_mosaic.version = 11 : i64} {
  func.func @_drelu_kernel(%arg0: i32, %arg1: memref<1xf32, #tpu.memory_space<smem>>, %arg2: memref<1xf32, #tpu.memory_space<smem>>, %arg3: memref<1x2048xf32, #tpu.memory_space<vmem>>, %arg4: memref<1x2048xf32, #tpu.memory_space<vmem>>) attributes {dimension_semantics = [#tpu.dimension_semantics<parallel>], iteration_bounds = array<i64: 1>, scalar_prefetch = 0 : i64, scratch_operands = 0 : i64, tpu.core_type = #tpu.core_type<tc>, window_params = [{transform_indices = @transform_0, window_bounds = array<i64: 1>}, {transform_indices = @transform_1, window_bounds = array<i64: 1>}, {transform_indices = @transform_2, window_bounds = array<i64: 1, 2048>}, {transform_indices = @transform_3, window_bounds = array<i64: 1, 2048>}]} {
    %c0 = arith.constant 0 : index
    %0 = memref.load %arg1[%c0] : memref<1xf32, #tpu.memory_space<smem>>
    %c0_0 = arith.constant 0 : index
    %1 = memref.load %arg2[%c0_0] : memref<1xf32, #tpu.memory_space<smem>>
    %c0_1 = arith.constant 0 : index
    %c0_2 = arith.constant 0 : index
    %2 = vector.load %arg3[%c0_1, %c0_2] : memref<1x2048xf32, #tpu.memory_space<vmem>>, vector<1x2048xf32>
    %cst = arith.constant 0.000000e+00 : f32
    %3 = vector.broadcast %cst : f32 to vector<1x2048xf32>
    %4 = arith.cmpf oge, %2, %3 : vector<1x2048xf32>
    %cst_3 = arith.constant 0.000000e+00 : f32
    %5 = arith.subf %cst_3, %1 : f32
    %6 = vector.broadcast %0 : f32 to vector<1x2048xf32>
    %7 = vector.broadcast %5 : f32 to vector<1x2048xf32>
    %8 = arith.select %4, %6, %7 : vector<1x2048xi1>, vector<1x2048xf32>
    %9 = arith.mulf %2, %8 : vector<1x2048xf32>
    %c0_4 = arith.constant 0 : index
    %c0_5 = arith.constant 0 : index
    %10 = vector.load %arg4[%c0_4, %c0_5] : memref<1x2048xf32, #tpu.memory_space<vmem>>, vector<1x2048xf32>
    tpu.vector_store %arg4[%c0_4, %c0_5], %9 {strides = array<i32>} : memref<1x2048xf32, #tpu.memory_space<vmem>>, vector<1x2048xf32>,
    return
  }
  func.func @transform_0(%arg0: i32) -> i32 {
    %c0_i32 = arith.constant 0 : i32
    %c0_i32_0 = arith.constant 0 : i32
    return %c0_i32 : i32
  }
  func.func @transform_1(%arg0: i32) -> i32 {
    %c0_i32 = arith.constant 0 : i32
    %c0_i32_0 = arith.constant 0 : i32
    return %c0_i32 : i32
  }
  func.func @transform_2(%arg0: i32) -> (i32, i32) {
    %c0_i32 = arith.constant 0 : i32
    %c0_i32_0 = arith.constant 0 : i32
    return %arg0, %c0_i32 : i32, i32
  }
  func.func @transform_3(%arg0: i32) -> (i32, i32) {
    %c0_i32 = arith.constant 0 : i32
    %c0_i32_0 = arith.constant 0 : i32
    return %arg0, %c0_i32 : i32, i32
  }
}

</mosaic_0001>

<llo_original>
// kernel: tpu_custom_call.1
$region0: #{tpu_custom_call.1}
  #allocation0 [shape = 'u32[]', space=smem, size = 0x4, offset = 0x4, fixed_abs, tag = 'smem constant byte address 0x4 - core index']
  #allocation1 [shape = 'u32[144,128]{1,0:T(1,128)}', space=vmem, size = 0x12000, scoped, tag = 'internal scratch']
  #allocation2 [shape = 'f32[1]{0:T(128)S(6)}', space=smem, size = 0x200, scoped, tag = 'scoped memory for tpu_custom_call.1']
  #allocation3 [shape = 'f32[1]{0:T(128)S(6)}', space=smem, size = 0x200, scoped, tag = 'scoped memory for tpu_custom_call.1']
  %s0 = inlined_call_operand.<no memory space> [shape: f32[1], index: 0, kind: input, shape index: {}]
  %s1 = inlined_call_operand.<no memory space> [shape: f32[1], index: 1, kind: input, shape index: {}]
  %s2 = inlined_call_operand.hbm [shape: f32[1,2048], index: 2, kind: input, shape index: {}]
  %s3 = inlined_call_operand.hbm [shape: f32[1,2048], index: 3, kind: output, shape index: {}]
  %s4 = sld [smem:[#allocation0]]
  $region26: #{tpu_custom_call.1} parent=0
    _
  %s6 = ssub.s32 1, %s4
  %s7 = scalar_select 0, %s6, %s4
  %8 = sst [smem:[#allocation2]] %s0
  %9 = sst [smem:[#allocation3]] %s1
  $region1: #{tpu_custom_call.1} parent=0
    #allocation4 [shape = 'u8[8192]{0}', space=vmem, size = 0x2000, scoped, tag = 'input window, operand 2, single buffered']
    #allocation5 [shape = 's32[1]{0}', space=sflag, size = 0x4, scoped, tag = 'scoped memory for tpu_custom_call.1']
    #allocation6 [shape = 's32[1]{0}', space=sflag, size = 0x4, scoped, tag = 'scoped memory for tpu_custom_call.1']
    #allocation7 [shape = 'u8[8192]{0}', space=vmem, size = 0x2000, scoped, tag = 'output window, operand 0, single buffered']
    %10 = vsyncpa [#allocation5], 0
    %11 = vsyncpa [#allocation6], 0
    // Predicated region
    $region2: #{tpu_custom_call.1} parent=1 // pred_check
      _
    $region3: #{tpu_custom_call.1} parent=1 // pred_check_branch
      %13 = sbr.rel (0) target = $region5
    $region4: #{tpu_custom_call.1} parent=1 // pred_region
      _
    $region5: #{tpu_custom_call.1} parent=1 // pred_fallthru
      _
    // Predicated region
    $region6: #{tpu_custom_call.1} parent=1 // pred_check
      _
    $region7: #{tpu_custom_call.1} parent=1 // pred_check_branch
      %15 = sbr.rel (0) target = $region9
    $region8: #{tpu_custom_call.1} parent=1 // pred_region
      _
    $region9: #{tpu_custom_call.1} parent=1 // pred_fallthru
      _
    // Predicated region
    $region10: #{tpu_custom_call.1} parent=1 // pred_check
      _
    $region11: #{tpu_custom_call.1} parent=1 // pred_check_branch
      %17 = sbr.rel (0) target = $region13
    $region12: #{tpu_custom_call.1} parent=1 // pred_region
      %s19 = ssub.s32 256, 256
      %20 = vsyncadd [#allocation5], %s19
      %s22 = sshll.u32 [#allocation4], 4
      %s23 = int_to_ptr.vmem [resolvable:$true] %s22
      %25 = dma.hbm_to_vmem [thread:$0]  %s2, 256, %s23, [#allocation5]
    $region13: #{tpu_custom_call.1} parent=1 // pred_fallthru
      _
    // Predicated region
    $region14: #{tpu_custom_call.1} parent=1 // pred_check
      _
    $region15: #{tpu_custom_call.1} parent=1 // pred_check_branch
      %27 = sbr.rel (0) target = $region17
    $region16: #{tpu_custom_call.1} parent=1 // pred_region
      %28 = dma.done [#allocation5], 256
    $region17: #{tpu_custom_call.1} parent=1 // pred_fallthru
      _
    %s29 = sld [smem:[#allocation2]]
    %s30 = sld [smem:[#allocation3]]
    %v31 = vld [vmem:[#allocation4] sm:$0xff]
    %v32 = vld [vmem:[#allocation4 + $0x8] sm:$0xff]
    %vm33 = vcmp.ge.f32.partialorder %v31, 0.0
    %vm34 = vcmp.ge.f32.partialorder %v32, 0.0
    %s35 = ssub.f32 0.0, %s30
    %v36 = vstv %s29
    %v37 = vstv %s35
    %v38 = vsel %vm33, %v36, %v37
    %v39 = vsel %vm34, %v36, %v37
    %v40 = vmul.f32 %v31, %v38
    %v41 = vmul.f32 %v32, %v39
    %42 = vst [vmem:[#allocation7] sm:$0xff] %v40
    %43 = vst [vmem:[#allocation7 + $0x8] sm:$0xff] %v41
    // Predicated region
    $region18: #{tpu_custom_call.1} parent=1 // pred_check
      _
    $region19: #{tpu_custom_call.1} parent=1 // pred_check_branch
      %45 = sbr.rel (0) target = $region21
    $region20: #{tpu_custom_call.1} parent=1 // pred_region
      %s47 = ssub.s32 256, 256
      %48 = vsyncadd [#allocation6], %s47
      %s50 = sshll.u32 [#allocation7], 4
      %s51 = int_to_ptr.vmem [resolvable:$true] %s50
      %53 = dma.vmem_to_hbm [thread:$0]  %s51, 256, %s3, [#allocation6]
    $region21: #{tpu_custom_call.1} parent=1 // pred_fallthru
      _
    // Predicated region
    $region22: #{tpu_custom_call.1} parent=1 // pred_check
      _
    $region23: #{tpu_custom_call.1} parent=1 // pred_check_branch
      %55 = sbr.rel (0) target = $region25
    $region24: #{tpu_custom_call.1} parent=1 // pred_region
      %56 = dma.done [#allocation6], 256
    $region25: #{tpu_custom_call.1} parent=1 // pred_fallthru
      _
    %57 = vsyncpa [#allocation5], 1
    %58 = vsyncpa [#allocation6], 1

</llo_original>
